<compile_context>
chip_gen: v6e
topology: v6e:2x2x1
jax: 0.10.0
libtpu: 0.0.40
codegen_flags: <defaults>
</compile_context>

<pallas_src>
import functools

import jax
import jax.numpy as jnp
from jax.experimental import pallas as pl
from jax.experimental.pallas import tpu as pltpu


def _round_up(x, m):
    return ((x + m - 1) // m) * m


def _dueling_kernel(
    x_ref,
    w1_ref, b1_ref,
    w2_ref, b2_ref,
    wh1_ref, bh1_ref,
    wh2_ref, bh2_ref,
    out_ref,
    *,
    action_size,
):
    f32 = jnp.float32
    bf16 = jnp.bfloat16

    # In-kernel cast: input arrives as f32 (no separate wrapper cast pass over HBM).
    x = x_ref[...].astype(bf16)                                        # (TB, S)

    # Shared trunk (bf16 MXU inputs, f32 accumulation, f32 biases).
    h = jnp.dot(x, w1_ref[...], preferred_element_type=f32) + b1_ref[...]
    h = jnp.maximum(h, 0.0).astype(bf16)
    h = jnp.dot(h, w2_ref[...], preferred_element_type=f32) + b2_ref[...]
    h = jnp.maximum(h, 0.0).astype(bf16)

    # Fused head layer 1: lanes [0:size3] = advantage hidden, [size3:2*size3] = value hidden.
    hv = jnp.dot(h, wh1_ref[...], preferred_element_type=f32) + bh1_ref[...]
    hv = jnp.maximum(hv, 0.0).astype(bf16)

    # Fused head layer 2 (value + mean folded into the weights):
    #   lanes [0:A]   = advantage_j + value
    #   lane  A       = mean(advantage)
    #   lanes (A:W)   = 0
    z = jnp.dot(hv, wh2_ref[...], preferred_element_type=f32) + bh2_ref[...]

    # Q = (a + v) - mean(a) on lanes [0:A]; lanes >= A are don't-care padding.
    out_ref[...] = z - z[:, action_size:action_size + 1]


def prepare_params(params):
    """One-time parameter preparation: fuse the two dueling heads, fold value and
    advantage-mean into the second head matmul, and cast matmul weights to bf16.
    Call once at parameter-load time; the result is what `dueling_forward` takes."""
    bf16 = jnp.bfloat16
    size3, A = params["wa2"].shape
    W = _round_up(A + 1, 8)          # lanes [0:A] = Q-path, lane A = mean(advantage)

    # Head layer 1: concatenate advantage / value hidden layers -> one (size2, 2*size3) matmul.
    wh1 = jnp.concatenate([params["wa1"], params["wv1"]], axis=1).astype(bf16)
    bh1 = jnp.concatenate([params["ba1"], params["bv1"]], axis=1)

    # Head layer 2: block weights so one matmul produces (a_j + v) in lanes [0:A]
    # and mean(a) in lane A.
    wh2 = jnp.zeros((2 * size3, W), jnp.float32)
    wh2 = wh2.at[:size3, :A].set(params["wa2"])                        # advantage block
    wh2 = wh2.at[size3:, :A].set(jnp.tile(params["wv2"], (1, A)))      # value broadcast
    wh2 = wh2.at[:size3, A].set(jnp.mean(params["wa2"], axis=1))       # mean(advantage)
    wh2 = wh2.astype(bf16)

    bh2 = jnp.zeros((1, W), jnp.float32)
    bh2 = bh2.at[:, :A].set(params["ba2"] + params["bv2"])
    bh2 = bh2.at[:, A].set(jnp.mean(params["ba2"]))

    arrays = dict(
        w1=params["w1"].astype(bf16), b1=params["b1"],
        w2=params["w2"].astype(bf16), b2=params["b2"],
        wh1=wh1, bh1=bh1, wh2=wh2, bh2=bh2,
    )
    meta = dict(action_size=A, out_width=W)
    return arrays, meta


def dueling_forward(state, prepared, meta, tile_b=1024):
    """state: (B, state_size) f32. prepared/meta: output of prepare_params()."""
    B, S = state.shape
    A = meta["action_size"]
    W = meta["out_width"]

    # --- batch tiling ------------------------------------------------------------
    b8 = _round_up(B, 8)
    tb = min(_round_up(tile_b, 8), b8)
    # v7x megacore: if the batch is large but would collapse to a single grid step,
    # split it so dimension_semantics=("parallel",) can shard across both TCs.
    if b8 > 256 and tb >= b8:
        tb = _round_up(pl.cdiv(b8, 2), 8)
    b_pad = _round_up(B, tb)

    x = state
    if b_pad != B:
        x = jnp.pad(x, ((0, b_pad - B), (0, 0)))
    grid = (pl.cdiv(b_pad, tb),)

    const2 = lambda i: (0, 0)
    kernel = functools.partial(_dueling_kernel, action_size=A)

    w1, b1 = prepared["w1"], prepared["b1"]
    w2, b2 = prepared["w2"], prepared["b2"]
    wh1, bh1 = prepared["wh1"], prepared["bh1"]
    wh2, bh2 = prepared["wh2"], prepared["bh2"]

    size1, size2 = w1.shape[1], w2.shape[1]
    size3x2 = wh1.shape[1]
    flops = int(2 * b_pad * (S * size1 + size1 * size2 + size2 * size3x2 + size3x2 * W))
    bytes_accessed = int(
        b_pad * S * 4                                     # x (f32 in)
        + (w1.size + w2.size + wh1.size + wh2.size) * 2   # bf16 weights
        + (b1.size + b2.size + bh1.size + bh2.size) * 4   # f32 biases
        + b_pad * W * 4                                   # f32 out
    )

    out = pl.pallas_call(
        kernel,
        out_shape=jax.ShapeDtypeStruct((b_pad, W), jnp.float32),
        grid_spec=pltpu.PrefetchScalarGridSpec(
            num_scalar_prefetch=0,
            grid=grid,
            in_specs=[
                pl.BlockSpec((tb, S), lambda i: (i, 0)),          # x: batch-tiled
                pl.BlockSpec(w1.shape, const2),                   # weights/biases:
                pl.BlockSpec(b1.shape, const2),                   #   full block,
                pl.BlockSpec(w2.shape, const2),                   #   constant index map
                pl.BlockSpec(b2.shape, const2),                   #   -> VMEM resident
                pl.BlockSpec(wh1.shape, const2),
                pl.BlockSpec(bh1.shape, const2),
                pl.BlockSpec(wh2.shape, const2),
                pl.BlockSpec(bh2.shape, const2),
            ],
            out_specs=pl.BlockSpec((tb, W), lambda i: (i, 0)),
        ),
        compiler_params=pltpu.CompilerParams(
            dimension_semantics=("parallel",),
            vmem_limit_bytes=32 * 1024 * 1024,
        ),
        cost_estimate=pl.CostEstimate(
            flops=flops, transcendentals=0, bytes_accessed=bytes_accessed),
    )(x, w1, b1, w2, b2, wh1, bh1, wh2, bh2)

    return out[:B, :A]


def init_params(key, state_size, action_size, size_1=64, size_2=64, size_3=64):
    """PyTorch nn.Linear-style init: U(-1/sqrt(fan_in), 1/sqrt(fan_in)). Weights stored (in, out)."""
    dims = [
        ("1", state_size, size_1),
        ("2", size_1, size_2),
        ("a1", size_2, size_3),
        ("a2", size_3, action_size),
        ("v1", size_2, size_3),
        ("v2", size_3, 1),
    ]
    params = {}
    keys = jax.random.split(key, 2 * len(dims))
    for i, (name, fan_in, fan_out) in enumerate(dims):
        bound = 1.0 / (fan_in ** 0.5)
        params[f"w{name}"] = jax.random.uniform(
            keys[2 * i], (fan_in, fan_out), jnp.float32, -bound, bound)
        params[f"b{name}"] = jax.random.uniform(
            keys[2 * i + 1], (1, fan_out), jnp.float32, -bound, bound)
    return params


def reference_forward_f32(state, params):
    relu = lambda t: jnp.maximum(t, 0.0)
    h = relu(state @ params["w1"] + params["b1"])
    h = relu(h @ params["w2"] + params["b2"])
    a = relu(h @ params["wa1"] + params["ba1"])
    a = a @ params["wa2"] + params["ba2"]
    v = relu(h @ params["wv1"] + params["bv1"])
    v = v @ params["wv2"] + params["bv2"]
    return v + a - jnp.mean(a, axis=1, keepdims=True)


def reference_forward_bf16(state, params):
    """Emulates the kernel's numerics: bf16 matmul inputs, f32 accumulation, f32 biases."""
    bf = lambda t: t.astype(jnp.bfloat16)
    dot = lambda a, b: jnp.dot(bf(a), bf(b), preferred_element_type=jnp.float32)
    relu = lambda t: jnp.maximum(t, 0.0)
    h = relu(dot(state, params["w1"]) + params["b1"])
    h = relu(dot(h, params["w2"]) + params["b2"])
    a = relu(dot(h, params["wa1"]) + params["ba1"])
    a = dot(a, params["wa2"]) + params["ba2"]
    v = relu(dot(h, params["wv1"]) + params["bv1"])
    v = dot(v, params["wv2"]) + params["bv2"]
    return v + a - jnp.mean(a, axis=1, keepdims=True)


if __name__ == "__main__":
    key = jax.random.PRNGKey(0)
    k_param, k_state = jax.random.split(key)

    batch = 8
    state_size = 16
    action_size = 4

    params = init_params(k_param, state_size, action_size)
    state = jax.random.normal(k_state, (batch, state_size), jnp.float32)

    prepared, meta = prepare_params(params)          # one-time fusion / bf16 cast
    q = dueling_forward(state, prepared, meta)
    q = jax.block_until_ready(q)
    assert q.shape == (batch, action_size)

    # Tight check against a bf16-input / f32-accumulation reference (the folded-mean
    # weight column adds a tiny extra bf16 rounding, hence 2e-3 instead of 1e-3).
    q_bf16_ref = reference_forward_bf16(state, params)
    assert jnp.allclose(q, q_bf16_ref, atol=2e-3, rtol=2e-3), "bf16-ref mismatch"

    # Loose sanity check against the pure-f32 PyTorch-equivalent reference.
    q_f32_ref = reference_forward_f32(state, params)
    assert jnp.allclose(q, q_f32_ref, atol=5e-2, rtol=5e-2), "f32-ref mismatch"

    print("KERNEL_OK")
</pallas_src>

<mosaic_0001>
module attributes {stable_mosaic.version = 11 : i64} {
  func.func @_dueling_kernel(%arg0: i32, %arg1: memref<8x16xf32, #tpu.memory_space<vmem>>, %arg2: memref<16x64xbf16, #tpu.memory_space<vmem>>, %arg3: memref<1x64xf32, #tpu.memory_space<vmem>>, %arg4: memref<64x64xbf16, #tpu.memory_space<vmem>>, %arg5: memref<1x64xf32, #tpu.memory_space<vmem>>, %arg6: memref<64x128xbf16, #tpu.memory_space<vmem>>, %arg7: memref<1x128xf32, #tpu.memory_space<vmem>>, %arg8: memref<128x8xbf16, #tpu.memory_space<vmem>>, %arg9: memref<1x8xf32, #tpu.memory_space<vmem>>, %arg10: memref<8x8xf32, #tpu.memory_space<vmem>>) attributes {dimension_semantics = [#tpu.dimension_semantics<parallel>], iteration_bounds = array<i64: 1>, scalar_prefetch = 0 : i64, scratch_operands = 0 : i64, tpu.core_type = #tpu.core_type<tc>, window_params = [{transform_indices = @transform_0, window_bounds = array<i64: 8, 16>}, {pipeline_mode = #tpu.pipeline_mode<synchronous>, transform_indices = @transform_1, window_bounds = array<i64: 16, 64>}, {pipeline_mode = #tpu.pipeline_mode<synchronous>, transform_indices = @transform_2, window_bounds = array<i64: 1, 64>}, {pipeline_mode = #tpu.pipeline_mode<synchronous>, transform_indices = @transform_3, window_bounds = array<i64: 64, 64>}, {pipeline_mode = #tpu.pipeline_mode<synchronous>, transform_indices = @transform_4, window_bounds = array<i64: 1, 64>}, {pipeline_mode = #tpu.pipeline_mode<synchronous>, transform_indices = @transform_5, window_bounds = array<i64: 64, 128>}, {pipeline_mode = #tpu.pipeline_mode<synchronous>, transform_indices = @transform_6, window_bounds = array<i64: 1, 128>}, {pipeline_mode = #tpu.pipeline_mode<synchronous>, transform_indices = @transform_7, window_bounds = array<i64: 128, 8>}, {pipeline_mode = #tpu.pipeline_mode<synchronous>, transform_indices = @transform_8, window_bounds = array<i64: 1, 8>}, {transform_indices = @transform_9, window_bounds = array<i64: 8, 8>}]} {
    %c0 = arith.constant 0 : index
    %c0_0 = arith.constant 0 : index
    %0 = vector.load %arg1[%c0, %c0_0] : memref<8x16xf32, #tpu.memory_space<vmem>>, vector<8x16xf32>
    %1 = arith.truncf %0 : vector<8x16xf32> to vector<8x16xbf16>
    %c0_1 = arith.constant 0 : index
    %c0_2 = arith.constant 0 : index
    %2 = vector.load %arg2[%c0_1, %c0_2] : memref<16x64xbf16, #tpu.memory_space<vmem>>, vector<16x64xbf16>
    %cst = arith.constant dense<0.000000e+00> : vector<8x64xf32>
    %3 = tpu.matmul %1, %2, %cst {dimension_numbers = #tpu.dot_dimension_numbers<[1], [0], [0], [1], [0, 0, 1, 1], [], []>} : vector<8x16xbf16>, vector<16x64xbf16>, vector<8x64xf32> -> vector<8x64xf32>
    %c0_3 = arith.constant 0 : index
    %c0_4 = arith.constant 0 : index
    %4 = vector.load %arg3[%c0_3, %c0_4] : memref<1x64xf32, #tpu.memory_space<vmem>>, vector<1x64xf32>
    %5 = vector.broadcast %4 : vector<1x64xf32> to vector<8x64xf32>
    %6 = arith.addf %3, %5 : vector<8x64xf32>
    %cst_5 = arith.constant 0.000000e+00 : f32
    %7 = vector.broadcast %cst_5 : f32 to vector<8x64xf32>
    %8 = arith.maximumf %6, %7 : vector<8x64xf32>
    %9 = arith.truncf %8 : vector<8x64xf32> to vector<8x64xbf16>
    %c0_6 = arith.constant 0 : index
    %c0_7 = arith.constant 0 : index
    %10 = vector.load %arg4[%c0_6, %c0_7] : memref<64x64xbf16, #tpu.memory_space<vmem>>, vector<64x64xbf16>
    %cst_8 = arith.constant dense<0.000000e+00> : vector<8x64xf32>
    %11 = tpu.matmul %9, %10, %cst_8 {dimension_numbers = #tpu.dot_dimension_numbers<[1], [0], [0], [1], [0, 0, 1, 1], [], []>} : vector<8x64xbf16>, vector<64x64xbf16>, vector<8x64xf32> -> vector<8x64xf32>
    %c0_9 = arith.constant 0 : index
    %c0_10 = arith.constant 0 : index
    %12 = vector.load %arg5[%c0_9, %c0_10] : memref<1x64xf32, #tpu.memory_space<vmem>>, vector<1x64xf32>
    %13 = vector.broadcast %12 : vector<1x64xf32> to vector<8x64xf32>
    %14 = arith.addf %11, %13 : vector<8x64xf32>
    %cst_11 = arith.constant 0.000000e+00 : f32
    %15 = vector.broadcast %cst_11 : f32 to vector<8x64xf32>
    %16 = arith.maximumf %14, %15 : vector<8x64xf32>
    %17 = arith.truncf %16 : vector<8x64xf32> to vector<8x64xbf16>
    %c0_12 = arith.constant 0 : index
    %c0_13 = arith.constant 0 : index
    %18 = vector.load %arg6[%c0_12, %c0_13] : memref<64x128xbf16, #tpu.memory_space<vmem>>, vector<64x128xbf16>
    %cst_14 = arith.constant dense<0.000000e+00> : vector<8x128xf32>
    %19 = tpu.matmul %17, %18, %cst_14 {dimension_numbers = #tpu.dot_dimension_numbers<[1], [0], [0], [1], [0, 0, 1, 1], [], []>} : vector<8x64xbf16>, vector<64x128xbf16>, vector<8x128xf32> -> vector<8x128xf32>
    %c0_15 = arith.constant 0 : index
    %c0_16 = arith.constant 0 : index
    %20 = vector.load %arg7[%c0_15, %c0_16] : memref<1x128xf32, #tpu.memory_space<vmem>>, vector<1x128xf32>
    %21 = vector.broadcast %20 : vector<1x128xf32> to vector<8x128xf32>
    %22 = arith.addf %19, %21 : vector<8x128xf32>
    %cst_17 = arith.constant 0.000000e+00 : f32
    %23 = vector.broadcast %cst_17 : f32 to vector<8x128xf32>
    %24 = arith.maximumf %22, %23 : vector<8x128xf32>
    %25 = arith.truncf %24 : vector<8x128xf32> to vector<8x128xbf16>
    %c0_18 = arith.constant 0 : index
    %c0_19 = arith.constant 0 : index
    %26 = vector.load %arg8[%c0_18, %c0_19] : memref<128x8xbf16, #tpu.memory_space<vmem>>, vector<128x8xbf16>
    %cst_20 = arith.constant dense<0.000000e+00> : vector<8x8xf32>
    %27 = tpu.matmul %25, %26, %cst_20 {dimension_numbers = #tpu.dot_dimension_numbers<[1], [0], [0], [1], [0, 0, 1, 1], [], []>} : vector<8x128xbf16>, vector<128x8xbf16>, vector<8x8xf32> -> vector<8x8xf32>
    %c0_21 = arith.constant 0 : index
    %c0_22 = arith.constant 0 : index
    %28 = vector.load %arg9[%c0_21, %c0_22] : memref<1x8xf32, #tpu.memory_space<vmem>>, vector<1x8xf32>
    %29 = vector.broadcast %28 : vector<1x8xf32> to vector<8x8xf32>
    %30 = arith.addf %27, %29 : vector<8x8xf32>
    %31 = vector.extract_strided_slice %30 {offsets = [0, 4], sizes = [8, 1], strides = [1, 1]} : vector<8x8xf32> to vector<8x1xf32>
    %32 = vector.broadcast %31 : vector<8x1xf32> to vector<8x8xf32>
    %33 = arith.subf %30, %32 : vector<8x8xf32>
    %c0_23 = arith.constant 0 : index
    %c0_24 = arith.constant 0 : index
    %34 = vector.load %arg10[%c0_23, %c0_24] : memref<8x8xf32, #tpu.memory_space<vmem>>, vector<8x8xf32>
    tpu.vector_store %arg10[%c0_23, %c0_24], %33 {strides = array<i32>} : memref<8x8xf32, #tpu.memory_space<vmem>>, vector<8x8xf32>,
    return
  }
  func.func @transform_0(%arg0: i32) -> (i32, i32) {
    %c0_i32 = arith.constant 0 : i32
    %c0_i32_0 = arith.constant 0 : i32
    return %arg0, %c0_i32 : i32, i32
  }
  func.func @transform_1(%arg0: i32) -> (i32, i32) {
    %c0_i32 = arith.constant 0 : i32
    %c0_i32_0 = arith.constant 0 : i32
    %c0_i32_1 = arith.constant 0 : i32
    return %c0_i32, %c0_i32_0 : i32, i32
  }
  func.func @transform_2(%arg0: i32) -> (i32, i32) {
    %c0_i32 = arith.constant 0 : i32
    %c0_i32_0 = arith.constant 0 : i32
    %c0_i32_1 = arith.constant 0 : i32
    return %c0_i32, %c0_i32_0 : i32, i32
  }
  func.func @transform_3(%arg0: i32) -> (i32, i32) {
    %c0_i32 = arith.constant 0 : i32
    %c0_i32_0 = arith.constant 0 : i32
    %c0_i32_1 = arith.constant 0 : i32
    return %c0_i32, %c0_i32_0 : i32, i32
  }
  func.func @transform_4(%arg0: i32) -> (i32, i32) {
    %c0_i32 = arith.constant 0 : i32
    %c0_i32_0 = arith.constant 0 : i32
    %c0_i32_1 = arith.constant 0 : i32
    return %c0_i32, %c0_i32_0 : i32, i32
  }
  func.func @transform_5(%arg0: i32) -> (i32, i32) {
    %c0_i32 = arith.constant 0 : i32
    %c0_i32_0 = arith.constant 0 : i32
    %c0_i32_1 = arith.constant 0 : i32
    return %c0_i32, %c0_i32_0 : i32, i32
  }
  func.func @transform_6(%arg0: i32) -> (i32, i32) {
    %c0_i32 = arith.constant 0 : i32
    %c0_i32_0 = arith.constant 0 : i32
    %c0_i32_1 = arith.constant 0 : i32
    return %c0_i32, %c0_i32_0 : i32, i32
  }
  func.func @transform_7(%arg0: i32) -> (i32, i32) {
    %c0_i32 = arith.constant 0 : i32
    %c0_i32_0 = arith.constant 0 : i32
    %c0_i32_1 = arith.constant 0 : i32
    return %c0_i32, %c0_i32_0 : i32, i32
  }
  func.func @transform_8(%arg0: i32) -> (i32, i32) {
    %c0_i32 = arith.constant 0 : i32
    %c0_i32_0 = arith.constant 0 : i32
    %c0_i32_1 = arith.constant 0 : i32
    return %c0_i32, %c0_i32_0 : i32, i32
  }
  func.func @transform_9(%arg0: i32) -> (i32, i32) {
    %c0_i32 = arith.constant 0 : i32
    %c0_i32_0 = arith.constant 0 : i32
    return %arg0, %c0_i32 : i32, i32
  }
}

</mosaic_0001>

<llo_original>
// kernel: tpu_custom_call.1
$region0: #{tpu_custom_call.1}
  #allocation0 [shape = 'u32[]', space=smem, size = 0x4, offset = 0x4, fixed_abs, tag = 'smem constant byte address 0x4 - core index']
  #allocation1 [shape = 'u32[144,128]{1,0:T(1,128)}', space=vmem, size = 0x12000, scoped, tag = 'internal scratch']
  %s0 = inlined_call_operand.hbm [shape: f32[8,16], index: 0, kind: input, shape index: {}]
  %s1 = inlined_call_operand.hbm [shape: bf16[16,64], index: 1, kind: input, shape index: {}]
  %s2 = inlined_call_operand.vmem [shape: f32[1,64], index: 2, kind: input, shape index: {}]
  %s3 = inlined_call_operand.vmem [shape: bf16[64,64], index: 3, kind: input, shape index: {}]
  %s4 = inlined_call_operand.vmem [shape: f32[1,64], index: 4, kind: input, shape index: {}]
  %s5 = inlined_call_operand.vmem [shape: bf16[64,128], index: 5, kind: input, shape index: {}]
  %s6 = inlined_call_operand.vmem [shape: f32[1,128], index: 6, kind: input, shape index: {}]
  %s7 = inlined_call_operand.vmem [shape: bf16[128,8], index: 7, kind: input, shape index: {}]
  %s8 = inlined_call_operand.vmem [shape: f32[1,8], index: 8, kind: input, shape index: {}]
  %s9 = inlined_call_operand.hbm [shape: f32[8,8], index: 9, kind: output, shape index: {}]
  %s10 = sld [smem:[#allocation0]]
  $region54: #{tpu_custom_call.1} parent=0
    _
  %s12 = ssub.s32 1, %s10
  %s13 = scalar_select 0, %s12, %s10
  $region1: #{tpu_custom_call.1} parent=0
    #allocation2 [shape = 'u8[4096]{0}', space=vmem, size = 0x1000, scoped, tag = 'input window, operand 0, single buffered']
    #allocation3 [shape = 's32[1]{0}', space=sflag, size = 0x4, scoped, tag = 'scoped memory for tpu_custom_call.1']
    #allocation4 [shape = 's32[1]{0}', space=sflag, size = 0x4, scoped, tag = 'scoped memory for tpu_custom_call.1']
    #allocation5 [shape = 'u8[4096]{0}', space=vmem, size = 0x1000, scoped, tag = 'input window, operand 1, single buffered']
    #allocation6 [shape = 's32[1]{0}', space=sflag, size = 0x4, scoped, tag = 'scoped memory for tpu_custom_call.1']
    #allocation7 [shape = 'u8[4096]{0}', space=vmem, size = 0x1000, scoped, tag = 'output window, operand 0, single buffered']
    %14 = vsyncpa [#allocation3], 0
    %15 = vsyncpa [#allocation6], 0
    %16 = vsyncpa [#allocation4], 0
    // Predicated region
    $region2: #{tpu_custom_call.1} parent=1 // pred_check
      _
    $region3: #{tpu_custom_call.1} parent=1 // pred_check_branch
      %18 = sbr.rel (0) target = $region5
    $region4: #{tpu_custom_call.1} parent=1 // pred_region
      %s20 = ssub.s32 128, 128
      %21 = vsyncadd [#allocation3], %s20
      %s23 = sshll.u32 [#allocation2], 4
      %s24 = int_to_ptr.vmem [resolvable:$true] %s23
      %26 = dma.hbm_to_vmem [thread:$0]  %s0, 128, %s24, [#allocation3]
    $region5: #{tpu_custom_call.1} parent=1 // pred_fallthru
      _
    // Predicated region
    $region6: #{tpu_custom_call.1} parent=1 // pred_check
      _
    $region7: #{tpu_custom_call.1} parent=1 // pred_check_branch
      %28 = sbr.rel (0) target = $region9
    $region8: #{tpu_custom_call.1} parent=1 // pred_region
      %s30 = ssub.s32 128, 128
      %31 = vsyncadd [#allocation6], %s30
      %s32 = sshll.u32 [#allocation5], 4
      %s33 = int_to_ptr.vmem [resolvable:$true] %s32
      %38 = dma.hbm_to_vmem [thread:$0]  %s1, 128, %s33, [#allocation6], 64, 64, 4
    $region9: #{tpu_custom_call.1} parent=1 // pred_fallthru
      _
    // Predicated region
    $region10: #{tpu_custom_call.1} parent=1 // pred_check
      _
    $region11: #{tpu_custom_call.1} parent=1 // pred_check_branch
      %40 = sbr.rel (0) target = $region13
    $region12: #{tpu_custom_call.1} parent=1 // pred_region
      _
    $region13: #{tpu_custom_call.1} parent=1 // pred_fallthru
      _
    // Predicated region
    $region14: #{tpu_custom_call.1} parent=1 // pred_check
      _
    $region15: #{tpu_custom_call.1} parent=1 // pred_check_branch
      %42 = sbr.rel (0) target = $region17
    $region16: #{tpu_custom_call.1} parent=1 // pred_region
      _
    $region17: #{tpu_custom_call.1} parent=1 // pred_fallthru
      _
    // Predicated region
    $region18: #{tpu_custom_call.1} parent=1 // pred_check
      _
    $region19: #{tpu_custom_call.1} parent=1 // pred_check_branch
      %44 = sbr.rel (0) target = $region21
    $region20: #{tpu_custom_call.1} parent=1 // pred_region
      _
    $region21: #{tpu_custom_call.1} parent=1 // pred_fallthru
      _
    // Predicated region
    $region22: #{tpu_custom_call.1} parent=1 // pred_check
      _
    $region23: #{tpu_custom_call.1} parent=1 // pred_check_branch
      %46 = sbr.rel (0) target = $region25
    $region24: #{tpu_custom_call.1} parent=1 // pred_region
      _
    $region25: #{tpu_custom_call.1} parent=1 // pred_fallthru
      _
    // Predicated region
    $region26: #{tpu_custom_call.1} parent=1 // pred_check
      _
    $region27: #{tpu_custom_call.1} parent=1 // pred_check_branch
      %48 = sbr.rel (0) target = $region29
    $region28: #{tpu_custom_call.1} parent=1 // pred_region
      _
    $region29: #{tpu_custom_call.1} parent=1 // pred_fallthru
      _
    // Predicated region
    $region30: #{tpu_custom_call.1} parent=1 // pred_check
      _
    $region31: #{tpu_custom_call.1} parent=1 // pred_check_branch
      %50 = sbr.rel (0) target = $region33
    $region32: #{tpu_custom_call.1} parent=1 // pred_region
      _
    $region33: #{tpu_custom_call.1} parent=1 // pred_fallthru
      _
    // Predicated region
    $region34: #{tpu_custom_call.1} parent=1 // pred_check
      _
    $region35: #{tpu_custom_call.1} parent=1 // pred_check_branch
      %52 = sbr.rel (0) target = $region37
    $region36: #{tpu_custom_call.1} parent=1 // pred_region
      _
    $region37: #{tpu_custom_call.1} parent=1 // pred_fallthru
      _
    // Predicated region
    $region38: #{tpu_custom_call.1} parent=1 // pred_check
      _
    $region39: #{tpu_custom_call.1} parent=1 // pred_check_branch
      %54 = sbr.rel (0) target = $region41
    $region40: #{tpu_custom_call.1} parent=1 // pred_region
      %55 = dma.done [#allocation3], 128
    $region41: #{tpu_custom_call.1} parent=1 // pred_fallthru
      _
    // Predicated region
    $region42: #{tpu_custom_call.1} parent=1 // pred_check
      _
    $region43: #{tpu_custom_call.1} parent=1 // pred_check_branch
      %57 = sbr.rel (0) target = $region45
    $region44: #{tpu_custom_call.1} parent=1 // pred_region
      %58 = dma.done [#allocation6], 128
    $region45: #{tpu_custom_call.1} parent=1 // pred_fallthru
      _
    %v60 = vld [vmem:[#allocation2] sm:$0xff]
    %v61 = vpack.c.bf16 %v60, %v60
    %v62 = vld [vmem:[#allocation5] sm:$0xf]
    %v63 = vld [vmem:[#allocation5 + $0x4] sm:$0xf]
    %v64 = vld [vmem:[%s2] sm:$0x1]
    %v66 = vlaneseq
    %v67 = vshrl.u32 %v66, 7
    %v68 = vsub.s32 0, %v67
    %v69 = vrot.slane %v64, %v68
    %v73 = vunpack.c.l.b16 %v62
    %v74 = vunpack.c.l.b16 %v63
    %v75 = vpack.c.b16 %v74, %v73
    %vm77 = vcmask 130048
    %v79 = vsel %vm77, %v61, 0
    %81 = vmatprep.subr.bf16.mxu0 0
    %82 = vmatpush1.bf16.msra.mxu0 0
    %83 = vmatprep.subr.bf16.mxu0 0
    %84 = vmatpush1.bf16.msra.mxu0 0
    %85 = vmatprep.subr.bf16.mxu0 0
    %86 = vmatpush1.bf16.msra.mxu0 0
    %87 = vmatprep.subr.bf16.mxu0 0
    %88 = vmatpush1.bf16.msra.mxu0 0
    %89 = vmatprep.subr.bf16.mxu0 0
    %90 = vmatpush1.bf16.msra.mxu0 0
    %91 = vmatprep.subr.bf16.mxu0 0
    %92 = vmatpush1.bf16.msra.mxu0 0
    %93 = vmatprep.subr.bf16.mxu0 0
    %94 = vmatpush1.bf16.msra.mxu0 0
    %95 = vmatprep.subr.bf16.mxu0 0
    %96 = vmatpush1.bf16.msra.mxu0 %v75
    %97 = vmatprep.subr.bf16.mxu0 0
    %98 = vmatpush2.bf16.msra.mxu0 0
    %99 = vmatprep.subr.bf16.mxu0 0
    %100 = vmatpush2.bf16.msra.mxu0 0
    %101 = vmatprep.subr.bf16.mxu0 0
    %102 = vmatpush2.bf16.msra.mxu0 0
    %103 = vmatprep.subr.bf16.mxu0 0
    %104 = vmatpush2.bf16.msra.mxu0 0
    %105 = vmatprep.subr.bf16.mxu0 0
    %106 = vmatpush2.bf16.msra.mxu0 0
    %107 = vmatprep.subr.bf16.mxu0 0
    %108 = vmatpush2.bf16.msra.mxu0 0
    %109 = vmatprep.subr.bf16.mxu0 0
    %110 = vmatpush2.bf16.msra.mxu0 0
    %111 = vmatprep.subr.bf16.mxu0 0
    %112 = vmatpush2.bf16.msra.mxu0 0
    %113 = vmatprep.mubr.bf16.mxu0 0
    %114 = vmatmul.mubr.bf16.gmra.mxu0 %v79
    %v115 = vpop.f32.mrf.mxu0
    %v116 = vadd.f32 %v69, %v115
    %v117 = vpop.f32.mrf.mxu0
    %v118 = vpop.f32.mrf.mxu0
    %v119 = vpop.f32.mrf.mxu0
    %120 = vdwg.mxu0
    %v121 = vmax.f32 %v116, 0.0
    %v122 = vpack.c.bf16 %v121, %v121
    %v123 = vld [vmem:[%s3] sm:$0xf]
    %v124 = vld [vmem:[%s3 + $0x4] sm:$0xf]
    %v125 = vld [vmem:[%s3 + $0x8] sm:$0xf]
    %v126 = vld [vmem:[%s3 + $0xc] sm:$0xf]
    %v127 = vld [vmem:[%s3 + $0x10] sm:$0xf]
    %v128 = vld [vmem:[%s3 + $0x14] sm:$0xf]
    %v129 = vld [vmem:[%s3 + $0x18] sm:$0xf]
    %v130 = vld [vmem:[%s3 + $0x1c] sm:$0xf]
    %v131 = vld [vmem:[%s4] sm:$0x1]
    %v133 = vlaneseq
    %v134 = vshrl.u32 %v133, 7
    %v135 = vsub.s32 0, %v134
    %v136 = vrot.slane %v131, %v135
    %v146 = vunpack.c.l.b16 %v123
    %v147 = vunpack.c.l.b16 %v124
    %v148 = vunpack.c.l.b16 %v125
    %v149 = vunpack.c.l.b16 %v126
    %v150 = vunpack.c.l.b16 %v127
    %v151 = vunpack.c.l.b16 %v128
    %v152 = vunpack.c.l.b16 %v129
    %v153 = vunpack.c.l.b16 %v130
    %v154 = vpack.c.b16 %v147, %v146
    %v155 = vpack.c.b16 %v149, %v148
    %v156 = vpack.c.b16 %v151, %v150
    %v157 = vpack.c.b16 %v153, %v152
    %vm162 = vcmask 523264
    %v164 = vsel %vm162, %v122, 0
    %166 = vmatprep.subr.bf16.mxu0 0
    %167 = vmatpush1.bf16.msra.mxu0 0
    %168 = vmatprep.subr.bf16.mxu0 0
    %169 = vmatpush1.bf16.msra.mxu0 0
    %170 = vmatprep.subr.bf16.mxu0 0
    %171 = vmatpush1.bf16.msra.mxu0 0
    %172 = vmatprep.subr.bf16.mxu0 0
    %173 = vmatpush1.bf16.msra.mxu0 0
    %174 = vmatprep.subr.bf16.mxu0 0
    %175 = vmatpush1.bf16.msra.mxu0 %v157
    %176 = vmatprep.subr.bf16.mxu0 0
    %177 = vmatpush1.bf16.msra.mxu0 %v156
    %178 = vmatprep.subr.bf16.mxu0 0
    %179 = vmatpush1.bf16.msra.mxu0 %v155
    %180 = vmatprep.subr.bf16.mxu0 0
    %181 = vmatpush1.bf16.msra.mxu0 %v154
    %182 = vmatprep.subr.bf16.mxu0 0
    %183 = vmatpush2.bf16.msra.mxu0 0
    %184 = vmatprep.subr.bf16.mxu0 0
    %185 = vmatpush2.bf16.msra.mxu0 0
    %186 = vmatprep.subr.bf16.mxu0 0
    %187 = vmatpush2.bf16.msra.mxu0 0
    %188 = vmatprep.subr.bf16.mxu0 0
    %189 = vmatpush2.bf16.msra.mxu0 0
    %190 = vmatprep.subr.bf16.mxu0 0
    %191 = vmatpush2.bf16.msra.mxu0 0
    %192 = vmatprep.subr.bf16.mxu0 0
    %193 = vmatpush2.bf16.msra.mxu0 0
    %194 = vmatprep.subr.bf16.mxu0 0
    %195 = vmatpush2.bf16.msra.mxu0 0
    %196 = vmatprep.subr.bf16.mxu0 0
    %197 = vmatpush2.bf16.msra.mxu0 0
    %198 = vmatprep.mubr.bf16.mxu0 0
    %199 = vmatmul.mubr.bf16.gmra.mxu0 %v164
    %v200 = vpop.f32.mrf.mxu0
    %v201 = vadd.f32 %v136, %v200
    %v202 = vpop.f32.mrf.mxu0
    %v203 = vpop.f32.mrf.mxu0
    %v204 = vpop.f32.mrf.mxu0
    %205 = vdwg.mxu0
    %v206 = vmax.f32 %v201, 0.0
    %v207 = vpack.c.bf16 %v206, %v206
    %v208 = vld [vmem:[%s5] sm:$0xf]
    %v209 = vld [vmem:[%s5 + $0x4] sm:$0xf]
    %v210 = vld [vmem:[%s5 + $0x8] sm:$0xf]
    %v211 = vld [vmem:[%s5 + $0xc] sm:$0xf]
    %v212 = vld [vmem:[%s5 + $0x10] sm:$0xf]
    %v213 = vld [vmem:[%s5 + $0x14] sm:$0xf]
    %v214 = vld [vmem:[%s5 + $0x18] sm:$0xf]
    %v215 = vld [vmem:[%s5 + $0x1c] sm:$0xf]
    %v216 = vld [vmem:[%s6] sm:$0x1]
    %v218 = vlaneseq
    %v219 = vshrl.u32 %v218, 7
    %v220 = vsub.s32 0, %v219
    %v221 = vrot.slane %v216, %v220
    %v231 = vunpack.c.l.b16 %v208
    %v232 = vunpack.c.l.b16 %v209
    %v233 = vunpack.c.l.b16 %v210
    %v234 = vunpack.c.l.b16 %v211
    %v235 = vunpack.c.l.b16 %v212
    %v236 = vunpack.c.l.b16 %v213
    %v237 = vunpack.c.l.b16 %v214
    %v238 = vunpack.c.l.b16 %v215
    %v239 = vpack.c.b16 %v232, %v231
    %v240 = vpack.c.b16 %v234, %v233
    %v241 = vpack.c.b16 %v236, %v235
    %v242 = vpack.c.b16 %v238, %v237
    %v248 = vsel %vm162, %v207, 0
    %250 = vmatprep.subr.bf16.mxu0 0
    %251 = vmatpush1.bf16.msra.mxu0 0
    %252 = vmatprep.subr.bf16.mxu0 0
    %253 = vmatpush1.bf16.msra.mxu0 0
    %254 = vmatprep.subr.bf16.mxu0 0
    %255 = vmatpush1.bf16.msra.mxu0 0
    %256 = vmatprep.subr.bf16.mxu0 0
    %257 = vmatpush1.bf16.msra.mxu0 0
    %258 = vmatprep.subr.bf16.mxu0 0
    %259 = vmatpush1.bf16.msra.mxu0 %v242
    %260 = vmatprep.subr.bf16.mxu0 0
    %261 = vmatpush1.bf16.msra.mxu0 %v241
    %262 = vmatprep.subr.bf16.mxu0 0
    %263 = vmatpush1.bf16.msra.mxu0 %v240
    %264 = vmatprep.subr.bf16.mxu0 0
    %265 = vmatpush1.bf16.msra.mxu0 %v239
    %266 = vmatprep.subr.bf16.mxu0 0
    %267 = vmatpush2.bf16.msra.mxu0 0
    %268 = vmatprep.subr.bf16.mxu0 0
    %269 = vmatpush2.bf16.msra.mxu0 0
    %270 = vmatprep.subr.bf16.mxu0 0
    %271 = vmatpush2.bf16.msra.mxu0 0
    %272 = vmatprep.subr.bf16.mxu0 0
    %273 = vmatpush2.bf16.msra.mxu0 0
    %274 = vmatprep.subr.bf16.mxu0 0
    %275 = vmatpush2.bf16.msra.mxu0 0
    %276 = vmatprep.subr.bf16.mxu0 0
    %277 = vmatpush2.bf16.msra.mxu0 0
    %278 = vmatprep.subr.bf16.mxu0 0
    %279 = vmatpush2.bf16.msra.mxu0 0
    %280 = vmatprep.subr.bf16.mxu0 0
    %281 = vmatpush2.bf16.msra.mxu0 0
    %282 = vmatprep.mubr.bf16.mxu0 0
    %283 = vmatmul.mubr.bf16.gmra.mxu0 %v248
    %v284 = vpop.f32.mrf.mxu0
    %v285 = vadd.f32 %v221, %v284
    %v286 = vpop.f32.mrf.mxu0
    %v287 = vpop.f32.mrf.mxu0
    %v288 = vpop.f32.mrf.mxu0
    %289 = vdwg.mxu0
    %v290 = vmax.f32 %v285, 0.0
    %v291 = vpack.c.bf16 %v290, %v290
    %v292 = vld [vmem:[%s7] sm:$0xf]
    %v293 = vld [vmem:[%s7 + $0x4] sm:$0xf]
    %v294 = vld [vmem:[%s7 + $0x8] sm:$0xf]
    %v295 = vld [vmem:[%s7 + $0xc] sm:$0xf]
    %v296 = vld [vmem:[%s7 + $0x10] sm:$0xf]
    %v297 = vld [vmem:[%s7 + $0x14] sm:$0xf]
    %v298 = vld [vmem:[%s7 + $0x18] sm:$0xf]
    %v299 = vld [vmem:[%s7 + $0x1c] sm:$0xf]
    %v300 = vld [vmem:[%s7 + $0x20] sm:$0xf]
    %v301 = vld [vmem:[%s7 + $0x24] sm:$0xf]
    %v302 = vld [vmem:[%s7 + $0x28] sm:$0xf]
    %v303 = vld [vmem:[%s7 + $0x2c] sm:$0xf]
    %v304 = vld [vmem:[%s7 + $0x30] sm:$0xf]
    %v305 = vld [vmem:[%s7 + $0x34] sm:$0xf]
    %v306 = vld [vmem:[%s7 + $0x38] sm:$0xf]
    %v307 = vld [vmem:[%s7 + $0x3c] sm:$0xf]
    %v308 = vld [vmem:[%s8] sm:$0x1]
    %v310 = vlaneseq
    %v311 = vshrl.u32 %v310, 7
    %v312 = vsub.s32 0, %v311
    %v313 = vrot.slane %v308, %v312
    %v331 = vunpack.c.l.b16 %v292
    %v332 = vunpack.c.l.b16 %v293
    %v333 = vunpack.c.l.b16 %v294
    %v334 = vunpack.c.l.b16 %v295
    %v335 = vunpack.c.l.b16 %v296
    %v336 = vunpack.c.l.b16 %v297
    %v337 = vunpack.c.l.b16 %v298
    %v338 = vunpack.c.l.b16 %v299
    %v339 = vunpack.c.l.b16 %v300
    %v340 = vunpack.c.l.b16 %v301
    %v341 = vunpack.c.l.b16 %v302
    %v342 = vunpack.c.l.b16 %v303
    %v343 = vunpack.c.l.b16 %v304
    %v344 = vunpack.c.l.b16 %v305
    %v345 = vunpack.c.l.b16 %v306
    %v346 = vunpack.c.l.b16 %v307
    %v347 = vpack.c.b16 %v332, %v331
    %v348 = vpack.c.b16 %v334, %v333
    %v349 = vpack.c.b16 %v336, %v335
    %v350 = vpack.c.b16 %v338, %v337
    %v351 = vpack.c.b16 %v340, %v339
    %v352 = vpack.c.b16 %v342, %v341
    %v353 = vpack.c.b16 %v344, %v343
    %v354 = vpack.c.b16 %v346, %v345
    %363 = vmatprep.subr.bf16.mxu0 0
    %364 = vmatpush1.bf16.msra.mxu0 %v354
    %365 = vmatprep.subr.bf16.mxu0 0
    %366 = vmatpush1.bf16.msra.mxu0 %v353
    %367 = vmatprep.subr.bf16.mxu0 0
    %368 = vmatpush1.bf16.msra.mxu0 %v352
    %369 = vmatprep.subr.bf16.mxu0 0
    %370 = vmatpush1.bf16.msra.mxu0 %v351
    %371 = vmatprep.subr.bf16.mxu0 0
    %372 = vmatpush1.bf16.msra.mxu0 %v350
    %373 = vmatprep.subr.bf16.mxu0 0
    %374 = vmatpush1.bf16.msra.mxu0 %v349
    %375 = vmatprep.subr.bf16.mxu0 0
    %376 = vmatpush1.bf16.msra.mxu0 %v348
    %377 = vmatprep.subr.bf16.mxu0 0
    %378 = vmatpush1.bf16.msra.mxu0 %v347
    %379 = vmatprep.subr.bf16.mxu0 0
    %380 = vmatpush2.bf16.msra.mxu0 0
    %381 = vmatprep.subr.bf16.mxu0 0
    %382 = vmatpush2.bf16.msra.mxu0 0
    %383 = vmatprep.subr.bf16.mxu0 0
    %384 = vmatpush2.bf16.msra.mxu0 0
    %385 = vmatprep.subr.bf16.mxu0 0
    %386 = vmatpush2.bf16.msra.mxu0 0
    %387 = vmatprep.subr.bf16.mxu0 0
    %388 = vmatpush2.bf16.msra.mxu0 0
    %389 = vmatprep.subr.bf16.mxu0 0
    %390 = vmatpush2.bf16.msra.mxu0 0
    %391 = vmatprep.subr.bf16.mxu0 0
    %392 = vmatpush2.bf16.msra.mxu0 0
    %393 = vmatprep.subr.bf16.mxu0 0
    %394 = vmatpush2.bf16.msra.mxu0 0
    %395 = vmatprep.mubr.bf16.mxu0 0
    %396 = vmatmul.mubr.bf16.gmra.mxu0 %v291
    %v397 = vpop.f32.mrf.mxu0
    %v398 = vadd.f32 %v313, %v397
    %v399 = vpop.f32.mrf.mxu0
    %v400 = vpop.f32.mrf.mxu0
    %v401 = vpop.f32.mrf.mxu0
    %402 = vdwg.mxu0
    %404 = vset.pattern.permute.xlu0 4
    %405 = vperm.xlu0 %404, %v398
    %v406 = vpop.permute.xlu0 %405
    %v408 = vsub.f32 %v398, %v406
    %vm409 = vcmask 64512
    %410 = vst.msk [vmem:[#allocation7] sm:$0xff] %vm409, %v408
    // Predicated region
    $region46: #{tpu_custom_call.1} parent=1 // pred_check
      _
    $region47: #{tpu_custom_call.1} parent=1 // pred_check_branch
      %412 = sbr.rel (0) target = $region49
    $region48: #{tpu_custom_call.1} parent=1 // pred_region
      %s414 = ssub.s32 128, 128
      %415 = vsyncadd [#allocation4], %s414
      %s417 = sshll.u32 [#allocation7], 4
      %s418 = int_to_ptr.vmem [resolvable:$true] %s417
      %420 = dma.vmem_to_hbm [thread:$0]  %s418, 128, %s9, [#allocation4]
    $region49: #{tpu_custom_call.1} parent=1 // pred_fallthru
      _
    // Predicated region
    $region50: #{tpu_custom_call.1} parent=1 // pred_check
      _
    $region51: #{tpu_custom_call.1} parent=1 // pred_check_branch
      %422 = sbr.rel (0) target = $region53
    $region52: #{tpu_custom_call.1} parent=1 // pred_region
      %423 = dma.done [#allocation4], 128
    $region53: #{tpu_custom_call.1} parent=1 // pred_fallthru
      _
    %424 = vsyncpa [#allocation3], 1
    %425 = vsyncpa [#allocation6], 1
    %426 = vsyncpa [#allocation4], 1

</llo_original>
